<compile_context>
chip_gen: v6e
topology: v6e:2x2x1
jax: 0.10.0
libtpu: 0.0.40
codegen_flags: <defaults>
</compile_context>

<pallas_src>
import jax
import jax.numpy as jnp
import numpy as np
from jax.experimental import pallas as pl
from jax.experimental.pallas import tpu as pltpu

# ----------------------------- module config --------------------------------
D_MODEL = 32
GLYPH_RES = 16                        # coord_size
COORD_SIZE = GLYPH_RES
NUM_SYSTEM_TOKENS = 4                 # e.g. pad / bos / eos / sep
FIRST_SYSTEM_TOKEN = GLYPH_RES * GLYPH_RES            # 256
VOCAB_SIZE = FIRST_SYSTEM_TOKEN + NUM_SYSTEM_TOKENS   # 260
PAD_TOKEN = FIRST_SYSTEM_TOKEN        # padding_idx of the token embedding
COORD_PAD = 0                         # padding_idx of the coord embeddings
MAX_SEQ_LEN = 8

BATCH = 2
SEQ = MAX_SEQ_LEN

# Fused-table row layout: [combined vocab rows | PE rows | zero padding].
PE_OFF = VOCAB_SIZE                                   # 260: positional rows (S)
USED_ROWS = PE_OFF + MAX_SEQ_LEN                      # 268
FUSED_ROWS = ((USED_ROWS + 127) // 128) * 128         # 384 = 3 x 128 lanes

# Static disjointness / layout guarantees (per correctness review): the token
# range [0, VOCAB_SIZE) and the PE range [PE_OFF, PE_OFF + SEQ) must never
# overlap, and both must sit inside the padded table.
assert PE_OFF >= VOCAB_SIZE
assert PE_OFF + MAX_SEQ_LEN <= FUSED_ROWS
assert SEQ & (SEQ - 1) == 0           # power of two -> '&' for position
assert (COORD_SIZE & (COORD_SIZE - 1)) == 0


# ------------------------------ Pallas kernel --------------------------------
def font_embed_kernel(tok_ref, table_ref, out_ref):
    """tok_ref: (B*S, 1) int32; table_ref: (FUSED_ROWS, D) f32; out: (B*S, D)."""
    tok = tok_ref[...]                                   # (BS, 1) int32
    bs = tok.shape[0]
    n_rows = table_ref.shape[0]

    # Sequence position of each flattened row (row = b * S + s  ->  s).
    pos = jax.lax.broadcasted_iota(jnp.int32, (bs, 1), 0) & (SEQ - 1)

    # 2-hot selection matrix over the fused table, table rows on the lane axis.
    # Token rows [0, 260) and PE rows [260, 268) are disjoint, so OR == sum of
    # one-hots; zero-padded rows 268..383 are never selected.
    lane = jax.lax.broadcasted_iota(jnp.int32, (bs, n_rows), 1)
    hot = ((lane == tok) | (lane == PE_OFF + pos)).astype(jnp.float32)

    # One MXU matmul = (token + coord_x + coord_y) embedding + positional enc.
    out_ref[...] = jnp.dot(hot, table_ref[...],
                           preferred_element_type=jnp.float32)


def font_embeddings_forward(font_tokens, fused_table):
    """font_tokens: (B, S) int32.  fused_table: (FUSED_ROWS, D_MODEL) f32,
    precomputed ONCE by build_fused_table (not rebuilt per call)."""
    B, S = font_tokens.shape
    BS = B * S
    tok2d = font_tokens.reshape(BS, 1).astype(jnp.int32)

    out2d = pl.pallas_call(
        font_embed_kernel,
        out_shape=jax.ShapeDtypeStruct((BS, D_MODEL), jnp.float32),
        # No grid: whole-problem, single invocation, no pipeline machinery.
        in_specs=[
            pl.BlockSpec(memory_space=pltpu.MemorySpace.VMEM),
            pl.BlockSpec(memory_space=pltpu.MemorySpace.VMEM),
        ],
        out_specs=pl.BlockSpec(memory_space=pltpu.MemorySpace.VMEM),
    )(tok2d, fused_table)

    return out2d.reshape(B, S, D_MODEL)


# ----------------------- parameter / table construction ----------------------
def make_sine_pe(seq_len, d_model):
    # TODO(synk): SinePositionalEmbedding assumed to be the standard additive
    # sin/cos positional encoding (no learnable scale, no dropout).
    pos = jnp.arange(seq_len, dtype=jnp.float32)[:, None]
    i = jnp.arange(0, d_model, 2, dtype=jnp.float32)
    inv_freq = jnp.exp(-jnp.log(10000.0) * i / d_model)
    pe = jnp.zeros((seq_len, d_model), jnp.float32)
    pe = pe.at[:, 0::2].set(jnp.sin(pos * inv_freq))
    pe = pe.at[:, 1::2].set(jnp.cos(pos * inv_freq))
    return pe


def make_params(key):
    k1, k2, k3 = jax.random.split(key, 3)
    emb = jax.random.normal(k1, (VOCAB_SIZE, D_MODEL), jnp.float32)
    emb = emb.at[PAD_TOKEN].set(0.0)                      # padding_idx row = 0
    cx = jax.random.normal(k2, (COORD_SIZE + 1, D_MODEL), jnp.float32)
    cx = cx.at[COORD_PAD].set(0.0)
    cy = jax.random.normal(k3, (COORD_SIZE + 1, D_MODEL), jnp.float32)
    cy = cy.at[COORD_PAD].set(0.0)
    return emb, cx, cy


def build_fused_table(emb_table, cx_table, cy_table, pe):
    """Init-time precompute: fold coord_x/coord_y into the token table and
    append the PE rows.  If the tables are trainable, rebuild this after each
    optimizer step (or keep this function inside the differentiated graph)."""
    vocab = jnp.arange(VOCAB_SIZE, dtype=jnp.int32)
    is_glyph = vocab < FIRST_SYSTEM_TOKEN
    points = jnp.where(is_glyph, vocab, 0)
    x_coords = points % COORD_SIZE + 1
    y_coords = points // COORD_SIZE + 1
    combined = emb_table + cx_table[x_coords] + cy_table[y_coords]  # (260, D)
    pad = jnp.zeros((FUSED_ROWS - USED_ROWS, D_MODEL), jnp.float32)
    # Single concatenate (no zeros + scatter chain).
    return jnp.concatenate([combined, pe, pad], axis=0)             # (384, D)


# ------------------------------- reference ------------------------------------
def reference_forward(font_tokens, emb_table, cx_table, cy_table, pe):
    is_glyph = font_tokens < FIRST_SYSTEM_TOKEN
    points = jnp.where(is_glyph, font_tokens, 0)
    x_coords = points % COORD_SIZE + 1
    y_coords = points // COORD_SIZE + 1
    out = (emb_table[font_tokens]
           + cx_table[x_coords]
           + cy_table[y_coords])
    return out + pe[None, :, :]


# --------------------------------- main ---------------------------------------
if __name__ == "__main__":
    key = jax.random.PRNGKey(0)
    kp, kt = jax.random.split(key)

    emb_table, cx_table, cy_table = make_params(kp)
    pe = make_sine_pe(SEQ, D_MODEL)

    # Built ONCE at init (this is the hoisted per-call work from the review).
    fused_table = jax.block_until_ready(
        build_fused_table(emb_table, cx_table, cy_table, pe))

    font_tokens = jax.random.randint(kt, (BATCH, SEQ), 0, VOCAB_SIZE,
                                     dtype=jnp.int32)
    # include a pad / system token deterministically to exercise that branch
    font_tokens = font_tokens.at[0, 0].set(PAD_TOKEN)

    out = font_embeddings_forward(font_tokens, fused_table)
    out = jax.block_until_ready(out)

    ref = reference_forward(font_tokens, emb_table, cx_table, cy_table, pe)
    np.testing.assert_allclose(np.asarray(out), np.asarray(ref),
                               rtol=1e-5, atol=1e-5)
    print("KERNEL_OK")
</pallas_src>

<mosaic_0001>
module attributes {stable_mosaic.version = 11 : i64} {
  func.func @font_embed_kernel(%arg0: memref<16x1xi32, #tpu.memory_space<vmem>>, %arg1: memref<384x32xf32, #tpu.memory_space<vmem>>, %arg2: memref<16x32xf32, #tpu.memory_space<vmem>>) attributes {dimension_semantics = [], scalar_prefetch = 0 : i64, scratch_operands = 0 : i64, tpu.core_type = #tpu.core_type<tc>} {
    %c0 = arith.constant 0 : index
    %c0_0 = arith.constant 0 : index
    %0 = vector.load %arg0[%c0, %c0_0] : memref<16x1xi32, #tpu.memory_space<vmem>>, vector<16x1xi32>
    %1 = tpu.iota {dimensions = array<i32: 0>} : vector<16x1xi32>
    %c7_i32 = arith.constant 7 : i32
    %2 = vector.broadcast %c7_i32 : i32 to vector<16x1xi32>
    %3 = arith.andi %1, %2 : vector<16x1xi32>
    %4 = tpu.iota {dimensions = array<i32: 1>} : vector<16x384xi32>
    %5 = vector.broadcast %0 : vector<16x1xi32> to vector<16x384xi32>
    %6 = arith.cmpi eq, %4, %5 : vector<16x384xi32>
    %c260_i32 = arith.constant 260 : i32
    %7 = vector.broadcast %c260_i32 : i32 to vector<16x1xi32>
    %8 = arith.addi %7, %3 : vector<16x1xi32>
    %9 = vector.broadcast %8 : vector<16x1xi32> to vector<16x384xi32>
    %10 = arith.cmpi eq, %4, %9 : vector<16x384xi32>
    %11 = arith.ori %6, %10 : vector<16x384xi1>
    %12 = arith.extui %11 : vector<16x384xi1> to vector<16x384xi32>
    %13 = arith.sitofp %12 : vector<16x384xi32> to vector<16x384xf32>
    %c0_1 = arith.constant 0 : index
    %c0_2 = arith.constant 0 : index
    %14 = vector.load %arg1[%c0_1, %c0_2] : memref<384x32xf32, #tpu.memory_space<vmem>>, vector<384x32xf32>
    %cst = arith.constant dense<0.000000e+00> : vector<16x32xf32>
    %15 = tpu.matmul %13, %14, %cst {dimension_numbers = #tpu.dot_dimension_numbers<[1], [0], [0], [1], [0, 0, 1, 1], [], []>} : vector<16x384xf32>, vector<384x32xf32>, vector<16x32xf32> -> vector<16x32xf32>
    %c0_3 = arith.constant 0 : index
    %c0_4 = arith.constant 0 : index
    %16 = vector.load %arg2[%c0_3, %c0_4] : memref<16x32xf32, #tpu.memory_space<vmem>>, vector<16x32xf32>
    tpu.vector_store %arg2[%c0_3, %c0_4], %15 {strides = array<i32>} : memref<16x32xf32, #tpu.memory_space<vmem>>, vector<16x32xf32>,
    return
  }
}

</mosaic_0001>

<llo_original>
// kernel: tpu_custom_call.1
$region0: #{tpu_custom_call.1}
  #allocation0 [shape = 'u32[]', space=smem, size = 0x4, offset = 0x4, fixed_abs, tag = 'smem constant byte address 0x4 - core index']
  #allocation1 [shape = 'u32[144,128]{1,0:T(1,128)}', space=vmem, size = 0x12000, scoped, tag = 'internal scratch']
  %s0 = inlined_call_operand.vmem [shape: s32[16,1], index: 0, kind: input, shape index: {}]
  %s1 = inlined_call_operand.vmem [shape: f32[384,32], index: 1, kind: input, shape index: {}]
  %s2 = inlined_call_operand.hbm [shape: f32[16,32], index: 2, kind: output, shape index: {}]
  %s3 = sld [smem:[#allocation0]]
  $region18: #{tpu_custom_call.1} parent=0
    _
  %s5 = ssub.s32 1, %s3
  %s6 = scalar_select 0, %s5, %s3
  $region1: #{tpu_custom_call.1} parent=0
    #allocation2 [shape = 'u8[8192]{0}', space=vmem, size = 0x2000, scoped, tag = 'output window, operand 0, single buffered']
    #allocation3 [shape = 's32[1]{0}', space=sflag, size = 0x4, scoped, tag = 'scoped memory for tpu_custom_call.1']
    %7 = vsyncpa [#allocation3], 0
    // Predicated region
    $region2: #{tpu_custom_call.1} parent=1 // pred_check
      _
    $region3: #{tpu_custom_call.1} parent=1 // pred_check_branch
      %9 = sbr.rel (0) target = $region5
    $region4: #{tpu_custom_call.1} parent=1 // pred_region
      _
    $region5: #{tpu_custom_call.1} parent=1 // pred_fallthru
      _
    // Predicated region
    $region6: #{tpu_custom_call.1} parent=1 // pred_check
      _
    $region7: #{tpu_custom_call.1} parent=1 // pred_check_branch
      %11 = sbr.rel (0) target = $region9
    $region8: #{tpu_custom_call.1} parent=1 // pred_region
      _
    $region9: #{tpu_custom_call.1} parent=1 // pred_fallthru
      _
    %v12 = vld [vmem:[%s0] sm:$0xff]
    %v13 = vld [vmem:[%s0 + $0x8] sm:$0xff]
    %v14 = vlaneseq
    %v15 = vshrl.u32 %v14, 7
    %v16 = vadd.s32 %v15, 8
    %v17 = vand.u32 %v15, 7
    %v18 = vand.u32 %v16, 7
    %v19 = vlaneseq
    %v20 = vand.u32 %v19, 127
    %v21 = vadd.s32 %v20, 128
    %v22 = vadd.s32 %v20, 256
    %23 = vset.pattern.permute.xlu0 0
    %24 = vperm.xlu0 %23, %v12
    %v25 = vpop.permute.xlu0 %24
    %26 = vset.pattern.permute.xlu0 0
    %27 = vperm.xlu0 %26, %v13
    %v28 = vpop.permute.xlu0 %27
    %vm29 = vcmp.eq.s32.totalorder %v20, %v25
    %vm30 = vcmp.eq.s32.totalorder %v21, %v25
    %vm31 = vcmp.eq.s32.totalorder %v22, %v25
    %vm32 = vcmp.eq.s32.totalorder %v20, %v28
    %vm33 = vcmp.eq.s32.totalorder %v21, %v28
    %vm34 = vcmp.eq.s32.totalorder %v22, %v28
    %v35 = vadd.s32 %v17, 260
    %v36 = vadd.s32 %v18, 260
    %vm37 = vcmp.eq.s32.totalorder %v20, %v35
    %vm38 = vcmp.eq.s32.totalorder %v21, %v35
    %vm39 = vcmp.eq.s32.totalorder %v22, %v35
    %vm40 = vcmp.eq.s32.totalorder %v20, %v36
    %vm41 = vcmp.eq.s32.totalorder %v21, %v36
    %vm42 = vcmp.eq.s32.totalorder %v22, %v36
    %vm43 = vmor %vm29, %vm37
    %vm44 = vmor %vm30, %vm38
    %vm45 = vmor %vm31, %vm39
    %vm46 = vmor %vm32, %vm40
    %vm47 = vmor %vm33, %vm41
    %vm48 = vmor %vm34, %vm42
    %v49 = vsel %vm43, 1, 0
    %v50 = vsel %vm44, 1, 0
    %v51 = vsel %vm45, 1, 0
    %v52 = vsel %vm46, 1, 0
    %v53 = vsel %vm47, 1, 0
    %v54 = vsel %vm48, 1, 0
    %v55 = vcvt.s32.f32 %v49
    %v56 = vcvt.s32.f32 %v50
    %v57 = vcvt.s32.f32 %v51
    %v58 = vcvt.s32.f32 %v52
    %v59 = vcvt.s32.f32 %v53
    %v60 = vcvt.s32.f32 %v54
    %v61 = vld [vmem:[%s1] sm:$0xff]
    %v62 = vld [vmem:[%s1 + $0x8] sm:$0xff]
    %v63 = vld [vmem:[%s1 + $0x10] sm:$0xff]
    %v64 = vld [vmem:[%s1 + $0x18] sm:$0xff]
    %v65 = vld [vmem:[%s1 + $0x20] sm:$0xff]
    %v66 = vld [vmem:[%s1 + $0x28] sm:$0xff]
    %v67 = vld [vmem:[%s1 + $0x30] sm:$0xff]
    %v68 = vld [vmem:[%s1 + $0x38] sm:$0xff]
    %v69 = vld [vmem:[%s1 + $0x40] sm:$0xff]
    %v70 = vld [vmem:[%s1 + $0x48] sm:$0xff]
    %v71 = vld [vmem:[%s1 + $0x50] sm:$0xff]
    %v72 = vld [vmem:[%s1 + $0x58] sm:$0xff]
    %v73 = vld [vmem:[%s1 + $0x60] sm:$0xff]
    %v74 = vld [vmem:[%s1 + $0x68] sm:$0xff]
    %v75 = vld [vmem:[%s1 + $0x70] sm:$0xff]
    %v76 = vld [vmem:[%s1 + $0x78] sm:$0xff]
    %v77 = vld [vmem:[%s1 + $0x80] sm:$0xff]
    %v78 = vld [vmem:[%s1 + $0x88] sm:$0xff]
    %v79 = vld [vmem:[%s1 + $0x90] sm:$0xff]
    %v80 = vld [vmem:[%s1 + $0x98] sm:$0xff]
    %v81 = vld [vmem:[%s1 + $0xa0] sm:$0xff]
    %v82 = vld [vmem:[%s1 + $0xa8] sm:$0xff]
    %v83 = vld [vmem:[%s1 + $0xb0] sm:$0xff]
    %v84 = vld [vmem:[%s1 + $0xb8] sm:$0xff]
    %v85 = vld [vmem:[%s1 + $0xc0] sm:$0xff]
    %v86 = vld [vmem:[%s1 + $0xc8] sm:$0xff]
    %v87 = vld [vmem:[%s1 + $0xd0] sm:$0xff]
    %v88 = vld [vmem:[%s1 + $0xd8] sm:$0xff]
    %v89 = vld [vmem:[%s1 + $0xe0] sm:$0xff]
    %v90 = vld [vmem:[%s1 + $0xe8] sm:$0xff]
    %v91 = vld [vmem:[%s1 + $0xf0] sm:$0xff]
    %v92 = vld [vmem:[%s1 + $0xf8] sm:$0xff]
    %v93 = vld [vmem:[%s1 + $0x100] sm:$0xff]
    %v94 = vld [vmem:[%s1 + $0x108] sm:$0xff]
    %v95 = vld [vmem:[%s1 + $0x110] sm:$0xff]
    %v96 = vld [vmem:[%s1 + $0x118] sm:$0xff]
    %v97 = vld [vmem:[%s1 + $0x120] sm:$0xff]
    %v98 = vld [vmem:[%s1 + $0x128] sm:$0xff]
    %v99 = vld [vmem:[%s1 + $0x130] sm:$0xff]
    %v100 = vld [vmem:[%s1 + $0x138] sm:$0xff]
    %v101 = vld [vmem:[%s1 + $0x140] sm:$0xff]
    %v102 = vld [vmem:[%s1 + $0x148] sm:$0xff]
    %v103 = vld [vmem:[%s1 + $0x150] sm:$0xff]
    %v104 = vld [vmem:[%s1 + $0x158] sm:$0xff]
    %v105 = vld [vmem:[%s1 + $0x160] sm:$0xff]
    %v106 = vld [vmem:[%s1 + $0x168] sm:$0xff]
    %v107 = vld [vmem:[%s1 + $0x170] sm:$0xff]
    %v108 = vld [vmem:[%s1 + $0x178] sm:$0xff]
    %109 = vmatprep.subr.mxu0 0.0
    %110 = vmatpush1.msra.mxu0 %v76
    %111 = vmatprep.subr.mxu0 0.0
    %112 = vmatpush1.msra.mxu0 %v75
    %113 = vmatprep.subr.mxu0 0.0
    %114 = vmatpush1.msra.mxu0 %v74
    %115 = vmatprep.subr.mxu0 0.0
    %116 = vmatpush1.msra.mxu0 %v73
    %117 = vmatprep.subr.mxu0 0.0
    %118 = vmatpush1.msra.mxu0 %v72
    %119 = vmatprep.subr.mxu0 0.0
    %120 = vmatpush1.msra.mxu0 %v71
    %121 = vmatprep.subr.mxu0 0.0
    %122 = vmatpush1.msra.mxu0 %v70
    %123 = vmatprep.subr.mxu0 0.0
    %124 = vmatpush1.msra.mxu0 %v69
    %125 = vmatprep.subr.mxu0 0.0
    %126 = vmatpush1.msra.mxu0 %v68
    %127 = vmatprep.subr.mxu0 0.0
    %128 = vmatpush1.msra.mxu0 %v67
    %129 = vmatprep.subr.mxu0 0.0
    %130 = vmatpush1.msra.mxu0 %v66
    %131 = vmatprep.subr.mxu0 0.0
    %132 = vmatpush1.msra.mxu0 %v65
    %133 = vmatprep.subr.mxu0 0.0
    %134 = vmatpush1.msra.mxu0 %v64
    %135 = vmatprep.subr.mxu0 0.0
    %136 = vmatpush1.msra.mxu0 %v63
    %137 = vmatprep.subr.mxu0 0.0
    %138 = vmatpush1.msra.mxu0 %v62
    %139 = vmatprep.subr.mxu0 0.0
    %140 = vmatpush1.msra.mxu0 %v61
    %141 = vmatprep.subr.mxu0 0.0
    %142 = vmatpush2.msra.mxu0 %v92
    %143 = vmatprep.subr.mxu0 0.0
    %144 = vmatpush2.msra.mxu0 %v91
    %145 = vmatprep.subr.mxu0 0.0
    %146 = vmatpush2.msra.mxu0 %v90
    %147 = vmatprep.subr.mxu0 0.0
    %148 = vmatpush2.msra.mxu0 %v89
    %149 = vmatprep.subr.mxu0 0.0
    %150 = vmatpush2.msra.mxu0 %v88
    %151 = vmatprep.subr.mxu0 0.0
    %152 = vmatpush2.msra.mxu0 %v87
    %153 = vmatprep.subr.mxu0 0.0
    %154 = vmatpush2.msra.mxu0 %v86
    %155 = vmatprep.subr.mxu0 0.0
    %156 = vmatpush2.msra.mxu0 %v85
    %157 = vmatprep.subr.mxu0 0.0
    %158 = vmatpush2.msra.mxu0 %v84
    %159 = vmatprep.subr.mxu0 0.0
    %160 = vmatpush2.msra.mxu0 %v83
    %161 = vmatprep.subr.mxu0 0.0
    %162 = vmatpush2.msra.mxu0 %v82
    %163 = vmatprep.subr.mxu0 0.0
    %164 = vmatpush2.msra.mxu0 %v81
    %165 = vmatprep.subr.mxu0 0.0
    %166 = vmatpush2.msra.mxu0 %v80
    %167 = vmatprep.subr.mxu0 0.0
    %168 = vmatpush2.msra.mxu0 %v79
    %169 = vmatprep.subr.mxu0 0.0
    %170 = vmatpush2.msra.mxu0 %v78
    %171 = vmatprep.subr.mxu0 0.0
    %172 = vmatpush2.msra.mxu0 %v77
    %173 = vmatprep.mubr.f32.mxu0 %v56
    %174 = vmatmul.mubr.f32.gmra.mxu0 %v55
    %v175 = vpop.f32.mrf.mxu0
    %v176 = vadd.f32 0.0, %v175
    %v177 = vpop.f32.mrf.mxu0
    %178 = vmatprep.mubr.f32.mxu0 %v59
    %179 = vmatmul.mubr.f32.gmra.mxu0 %v58
    %v180 = vpop.f32.mrf.mxu0
    %v181 = vadd.f32 0.0, %v180
    %v182 = vpop.f32.mrf.mxu0
    %183 = vdwg.mxu0
    %184 = vmatprep.subr.mxu0 0.0
    %185 = vmatpush1.msra.mxu0 %v108
    %186 = vmatprep.subr.mxu0 0.0
    %187 = vmatpush1.msra.mxu0 %v107
    %188 = vmatprep.subr.mxu0 0.0
    %189 = vmatpush1.msra.mxu0 %v106
    %190 = vmatprep.subr.mxu0 0.0
    %191 = vmatpush1.msra.mxu0 %v105
    %192 = vmatprep.subr.mxu0 0.0
    %193 = vmatpush1.msra.mxu0 %v104
    %194 = vmatprep.subr.mxu0 0.0
    %195 = vmatpush1.msra.mxu0 %v103
    %196 = vmatprep.subr.mxu0 0.0
    %197 = vmatpush1.msra.mxu0 %v102
    %198 = vmatprep.subr.mxu0 0.0
    %199 = vmatpush1.msra.mxu0 %v101
    %200 = vmatprep.subr.mxu0 0.0
    %201 = vmatpush1.msra.mxu0 %v100
    %202 = vmatprep.subr.mxu0 0.0
    %203 = vmatpush1.msra.mxu0 %v99
    %204 = vmatprep.subr.mxu0 0.0
    %205 = vmatpush1.msra.mxu0 %v98
    %206 = vmatprep.subr.mxu0 0.0
    %207 = vmatpush1.msra.mxu0 %v97
    %208 = vmatprep.subr.mxu0 0.0
    %209 = vmatpush1.msra.mxu0 %v96
    %210 = vmatprep.subr.mxu0 0.0
    %211 = vmatpush1.msra.mxu0 %v95
    %212 = vmatprep.subr.mxu0 0.0
    %213 = vmatpush1.msra.mxu0 %v94
    %214 = vmatprep.subr.mxu0 0.0
    %215 = vmatpush1.msra.mxu0 %v93
    %216 = vmatprep.subr.mxu0 0.0
    %217 = vmatpush2.msra.mxu0 0.0
    %218 = vmatprep.subr.mxu0 0.0
    %219 = vmatpush2.msra.mxu0 0.0
    %220 = vmatprep.subr.mxu0 0.0
    %221 = vmatpush2.msra.mxu0 0.0
    %222 = vmatprep.subr.mxu0 0.0
    %223 = vmatpush2.msra.mxu0 0.0
    %224 = vmatprep.subr.mxu0 0.0
    %225 = vmatpush2.msra.mxu0 0.0
    %226 = vmatprep.subr.mxu0 0.0
    %227 = vmatpush2.msra.mxu0 0.0
    %228 = vmatprep.subr.mxu0 0.0
    %229 = vmatpush2.msra.mxu0 0.0
    %230 = vmatprep.subr.mxu0 0.0
    %231 = vmatpush2.msra.mxu0 0.0
    %232 = vmatprep.subr.mxu0 0.0
    %233 = vmatpush2.msra.mxu0 0.0
    %234 = vmatprep.subr.mxu0 0.0
    %235 = vmatpush2.msra.mxu0 0.0
    %236 = vmatprep.subr.mxu0 0.0
    %237 = vmatpush2.msra.mxu0 0.0
    %238 = vmatprep.subr.mxu0 0.0
    %239 = vmatpush2.msra.mxu0 0.0
    %240 = vmatprep.subr.mxu0 0.0
    %241 = vmatpush2.msra.mxu0 0.0
    %242 = vmatprep.subr.mxu0 0.0
    %243 = vmatpush2.msra.mxu0 0.0
    %244 = vmatprep.subr.mxu0 0.0
    %245 = vmatpush2.msra.mxu0 0.0
    %246 = vmatprep.subr.mxu0 0.0
    %247 = vmatpush2.msra.mxu0 0.0
    %248 = vmatprep.mubr.f32.mxu0 0.0
    %249 = vmatmul.mubr.f32.gmra.mxu0 %v57
    %v250 = vpop.f32.mrf.mxu0
    %v251 = vadd.f32 %v176, %v250
    %v252 = vpop.f32.mrf.mxu0
    %253 = vmatprep.mubr.f32.mxu0 0.0
    %254 = vmatmul.mubr.f32.gmra.mxu0 %v60
    %v255 = vpop.f32.mrf.mxu0
    %v256 = vadd.f32 %v181, %v255
    %v257 = vpop.f32.mrf.mxu0
    %258 = vdwg.mxu0
    %vm259 = vcmask 261120
    %260 = vst.msk [vmem:[#allocation2] sm:$0xff] %vm259, %v251
    %261 = vst.msk [vmem:[#allocation2 + $0x8] sm:$0xff] %vm259, %v256
    // Predicated region
    $region10: #{tpu_custom_call.1} parent=1 // pred_check
      _
    $region11: #{tpu_custom_call.1} parent=1 // pred_check_branch
      %263 = sbr.rel (0) target = $region13
    $region12: #{tpu_custom_call.1} parent=1 // pred_region
      %s265 = ssub.s32 256, 256
      %266 = vsyncadd [#allocation3], %s265
      %s267 = sshll.u32 [#allocation2], 4
      %s268 = int_to_ptr.vmem [resolvable:$true] %s267
      %273 = dma.vmem_to_hbm [thread:$0]  %s268, 256, %s2, [#allocation3], 128, 128, 8
    $region13: #{tpu_custom_call.1} parent=1 // pred_fallthru
      _
    // Predicated region
    $region14: #{tpu_custom_call.1} parent=1 // pred_check
      _
    $region15: #{tpu_custom_call.1} parent=1 // pred_check_branch
      %275 = sbr.rel (0) target = $region17
    $region16: #{tpu_custom_call.1} parent=1 // pred_region
      %276 = dma.done [#allocation3], 256
    $region17: #{tpu_custom_call.1} parent=1 // pred_fallthru
      _
    %277 = vsyncpa [#allocation3], 1

</llo_original>
